<compile_context>
chip_gen: v6e
topology: v6e:2x2x1
jax: 0.10.0
libtpu: 0.0.40
codegen_flags: <defaults>
</compile_context>

<pallas_src>
import functools

import jax
import jax.numpy as jnp
from jax.experimental import pallas as pl
from jax.experimental.pallas import tpu as pltpu


def _round_up(x, m):
    return (x + m - 1) // m * m


def _patch_embed_kernel(p_ref, w_ref, pos_ref, o_ref):
    # p_ref  : (TN, K)  bf16 patch rows for this (N-tile, batch) grid step
    # w_ref  : (K, D)   bf16 flattened conv weight (resident, constant index)
    # pos_ref: (TN, D)  bf16 positional embedding with conv bias folded in
    # o_ref  : (TN, D)  output tile (out_dtype, bf16 by default)
    acc = jnp.dot(p_ref[...], w_ref[...],
                  preferred_element_type=jnp.float32)        # MXU, f32 accumulate
    o_ref[...] = (acc + pos_ref[...].astype(jnp.float32)).astype(o_ref.dtype)


def prepare_patch_embedding_params(w, b, pos, *, compute_dtype=jnp.bfloat16):
    """One-time parameter prep (hoisted out of the per-call path).

    w:   [D, C, P, P]  conv weight
    b:   [D]           conv bias
    pos: [1, N, D]     positional embedding
    Returns (w_mat [K, D] bf16, posb [N, D] bf16) with the bias folded into pos.
    """
    D, C, P, _ = w.shape
    K = C * P * P
    N = pos.shape[1]
    w_mat = w.reshape(D, K).T.astype(compute_dtype)                       # [K, D]
    posb = (pos.reshape(N, D).astype(jnp.float32)
            + b.astype(jnp.float32)[None, :]).astype(compute_dtype)       # [N, D]
    return w_mat, posb


def patch_embedding(x, w_mat, posb, patch_size, *,
                    compute_dtype=jnp.bfloat16, out_dtype=None):
    """x: [B, C, H, W] NCHW image; returns [B, N, D] patch embeddings.

    out_dtype defaults to compute_dtype (bf16) per the perf review; pass
    jnp.float32 if the downstream consumer needs full precision.
    """
    B, C, H, W = x.shape
    P = patch_size
    Hp, Wp = H // P, W // P
    N = Hp * Wp
    K, D = w_mat.shape
    if out_dtype is None:
        out_dtype = compute_dtype

    # im2col in compute dtype (cast BEFORE the transpose so any materialized
    # copy is bf16). Flatten order (c, ph, pw) matches w.reshape(D, K).
    xq = x.astype(compute_dtype)
    patches = (xq.reshape(B, C, Hp, P, Wp, P)
                 .transpose(0, 2, 4, 1, 3, 5)
                 .reshape(B, N, K))

    # --- tile selection (no padding: full-K / full-D blocks are always legal,
    # ragged last N tile is clipped by Pallas) ---
    TN_CAP = 512                       # multiple of 16 (bf16 sublane) and 128 (MXU rows)
    if N <= TN_CAP:
        if B == 1 and N >= 32:
            # v7x megacore: guarantee >=2 grid steps on a parallel axis at B=1.
            TN = _round_up(pl.cdiv(N, 2), 16)
        else:
            TN = N                     # single full-extent N tile per batch element
    else:
        TN = TN_CAP
    n_tiles = pl.cdiv(N, TN)
    # NOTE: if D < 128 the output stores are lane-masked (fine for small demo
    # shapes; real ViT dims 768/1024 are lane-dense). K is consumed as the full
    # contraction extent, so un-aligned K (e.g. C=3, P=14) stays correct.

    grid = (n_tiles, B)                # batch innermost: pos/weight stay resident
    out = pl.pallas_call(
        _patch_embed_kernel,
        out_shape=jax.ShapeDtypeStruct((B, N, D), out_dtype),
        grid_spec=pltpu.PrefetchScalarGridSpec(
            num_scalar_prefetch=0,
            grid=grid,
            in_specs=[
                # patches: squeeze the size-1 batch dim, tile N, full K
                pl.BlockSpec((None, TN, K), lambda ni, bi: (bi, ni, 0)),
                # weight: constant block index -> DMA'd once, stays resident
                pl.BlockSpec((K, D), lambda ni, bi: (0, 0)),
                # pos(+bias): depends only on the outer (N-tile) axis -> not
                # re-fetched across the inner batch steps
                pl.BlockSpec((TN, D), lambda ni, bi: (ni, 0)),
            ],
            out_specs=pl.BlockSpec((None, TN, D), lambda ni, bi: (bi, ni, 0)),
        ),
        compiler_params=pltpu.CompilerParams(
            dimension_semantics=("parallel", "parallel"),
            # Let XLA fuse the im2col reshape/transpose/cast into the patches
            # input DMA instead of materializing it in HBM.
            allow_input_fusion=[True, False, False],
        ),
    )(patches, w_mat, posb)
    return out


def patch_embedding_ref(x, w, b, pos):
    """Pure-JAX f32 reference mirroring the PyTorch forward."""
    D = w.shape[0]
    P = w.shape[2]
    y = jax.lax.conv_general_dilated(
        x, w, window_strides=(P, P), padding="VALID",
        dimension_numbers=("NCHW", "OIHW", "NCHW"))
    y = y + b.reshape(1, D, 1, 1)
    B_, D_, Hp, Wp = y.shape
    y = y.reshape(B_, D_, Hp * Wp).transpose(0, 2, 1)   # flatten(2).transpose(1,2)
    return y + pos


if __name__ == "__main__":
    # Small config consistent with the module:
    # img_size=16, patch_size=4, in_channels=4, embed_dim=32 -> num_patches=16
    B, C, IMG, P, D = 2, 4, 16, 4, 32
    N = (IMG // P) ** 2

    key = jax.random.PRNGKey(0)
    kx, kw, kb, kp = jax.random.split(key, 4)
    x = jax.random.normal(kx, (B, C, IMG, IMG), dtype=jnp.float32)
    w = jax.random.normal(kw, (D, C, P, P), dtype=jnp.float32) * 0.02
    b = jax.random.normal(kb, (D,), dtype=jnp.float32) * 0.02
    pos = jax.random.normal(kp, (1, N, D), dtype=jnp.float32)

    # Parameter prep hoisted out of the forward path (done once at init).
    w_mat, posb = prepare_patch_embedding_params(w, b, pos)

    fwd = jax.jit(patch_embedding, static_argnums=(3,))
    out = fwd(x, w_mat, posb, P)
    out = jax.block_until_ready(out)

    ref = patch_embedding_ref(x, w, b, pos)
    assert out.shape == (B, N, D), out.shape
    # bf16 operands / bf16 pos / bf16 output -> relative-error check vs f32 ref.
    rel_err = jnp.max(jnp.abs(out.astype(jnp.float32) - ref)) / (
        jnp.max(jnp.abs(ref)) + 1e-6)
    assert rel_err < 3e-2, f"relative err {rel_err}"

    print("KERNEL_OK")
</pallas_src>

<mosaic_0001>
module attributes {stable_mosaic.version = 11 : i64} {
  func.func @_patch_embed_kernel(%arg0: i32, %arg1: i32, %arg2: memref<1x16x64xbf16, #tpu.memory_space<vmem>>, %arg3: memref<64x32xbf16, #tpu.memory_space<vmem>>, %arg4: memref<16x32xbf16, #tpu.memory_space<vmem>>, %arg5: memref<1x16x32xbf16, #tpu.memory_space<vmem>>) attributes {dimension_semantics = [#tpu.dimension_semantics<parallel>, #tpu.dimension_semantics<parallel>], iteration_bounds = array<i64: 1, 2>, scalar_prefetch = 0 : i64, scratch_operands = 0 : i64, tpu.core_type = #tpu.core_type<tc>, window_params = [{transform_indices = @transform_0, window_bounds = array<i64: 1, 16, 64>}, {pipeline_mode = #tpu.pipeline_mode<synchronous>, transform_indices = @transform_1, window_bounds = array<i64: 64, 32>}, {transform_indices = @transform_2, window_bounds = array<i64: 16, 32>}, {transform_indices = @transform_3, window_bounds = array<i64: 1, 16, 32>}]} {
    %c0 = arith.constant 0 : index
    %c0_0 = arith.constant 0 : index
    %c0_1 = arith.constant 0 : index
    %0 = vector.load %arg2[%c0, %c0_0, %c0_1] : memref<1x16x64xbf16, #tpu.memory_space<vmem>>, vector<1x16x64xbf16>
    %1 = vector.shape_cast %0 : vector<1x16x64xbf16> to vector<16x64xbf16>
    %c0_2 = arith.constant 0 : index
    %c0_3 = arith.constant 0 : index
    %2 = vector.load %arg3[%c0_2, %c0_3] : memref<64x32xbf16, #tpu.memory_space<vmem>>, vector<64x32xbf16>
    %cst = arith.constant dense<0.000000e+00> : vector<16x32xf32>
    %3 = tpu.matmul %1, %2, %cst {dimension_numbers = #tpu.dot_dimension_numbers<[1], [0], [0], [1], [0, 0, 1, 1], [], []>} : vector<16x64xbf16>, vector<64x32xbf16>, vector<16x32xf32> -> vector<16x32xf32>
    %c0_4 = arith.constant 0 : index
    %c0_5 = arith.constant 0 : index
    %4 = vector.load %arg4[%c0_4, %c0_5] : memref<16x32xbf16, #tpu.memory_space<vmem>>, vector<16x32xbf16>
    %5 = arith.extf %4 : vector<16x32xbf16> to vector<16x32xf32>
    %6 = arith.addf %3, %5 : vector<16x32xf32>
    %7 = arith.truncf %6 : vector<16x32xf32> to vector<16x32xbf16>
    %c0_6 = arith.constant 0 : index
    %c0_7 = arith.constant 0 : index
    %c0_8 = arith.constant 0 : index
    %8 = vector.load %arg5[%c0_6, %c0_7, %c0_8] : memref<1x16x32xbf16, #tpu.memory_space<vmem>>, vector<1x16x32xbf16>
    %9 = vector.shape_cast %8 : vector<1x16x32xbf16> to vector<16x32xbf16>
    %10 = vector.shape_cast %7 : vector<16x32xbf16> to vector<1x16x32xbf16>
    tpu.vector_store %arg5[%c0_6, %c0_7, %c0_8], %10 {strides = array<i32>} : memref<1x16x32xbf16, #tpu.memory_space<vmem>>, vector<1x16x32xbf16>,
    return
  }
  func.func @transform_0(%arg0: i32, %arg1: i32) -> (i32, i32, i32) {
    %c0_i32 = arith.constant 0 : i32
    %c0_i32_0 = arith.constant 0 : i32
    return %arg1, %arg0, %c0_i32 : i32, i32, i32
  }
  func.func @transform_1(%arg0: i32, %arg1: i32) -> (i32, i32) {
    %c0_i32 = arith.constant 0 : i32
    %c0_i32_0 = arith.constant 0 : i32
    %c0_i32_1 = arith.constant 0 : i32
    return %c0_i32, %c0_i32_0 : i32, i32
  }
  func.func @transform_2(%arg0: i32, %arg1: i32) -> (i32, i32) {
    %c0_i32 = arith.constant 0 : i32
    %c0_i32_0 = arith.constant 0 : i32
    return %arg0, %c0_i32 : i32, i32
  }
  func.func @transform_3(%arg0: i32, %arg1: i32) -> (i32, i32, i32) {
    %c0_i32 = arith.constant 0 : i32
    %c0_i32_0 = arith.constant 0 : i32
    return %arg1, %arg0, %c0_i32 : i32, i32, i32
  }
}

</mosaic_0001>

<llo_original>
// kernel: patch_embedding.1
$region0: #{patch_embedding.1}
  #allocation0 [shape = 'u32[]', space=smem, size = 0x4, offset = 0x4, fixed_abs, tag = 'smem constant byte address 0x4 - core index']
  #allocation1 [shape = 'u32[144,128]{1,0:T(1,128)}', space=vmem, size = 0x12000, scoped, tag = 'internal scratch']
  %s0 = inlined_call_operand.vmem [shape: bf16[2,16,64], index: 0, kind: input, shape index: {}]
  %s1 = inlined_call_operand.vmem [shape: bf16[64,32], index: 1, kind: input, shape index: {}]
  %s2 = inlined_call_operand.vmem [shape: bf16[16,32], index: 2, kind: input, shape index: {}]
  %s3 = inlined_call_operand.hbm [shape: bf16[2,16,32], index: 3, kind: output, shape index: {}]
  %s4 = sld [smem:[#allocation0]]
  $region45: #{patch_embedding.1} parent=0
    _
  %s6 = ssub.s32 1, %s4
  %s7 = scalar_select 0, %s6, %s4
  $region1: #{patch_embedding.1} parent=0
    #allocation2 [shape = 'u8[8192]{0}', space=vmem, size = 0x2000, scoped, tag = 'output window, operand 0']
    #allocation3 [shape = 's32[2]{0}', space=sflag, size = 0x8, scoped, tag = 'scoped memory for patch_embedding.1']
    %8 = vsyncpa [#allocation3], 0
    %s9 = scalar_lea.sflag [#allocation3], 1
    %10 = vsyncpa %s9, 0
    loop: start=0, step=1, limit=4
    $region2: #{patch_embedding.1} parent=1 // loop_pre_header
      _
    $region3: #{patch_embedding.1} parent=1 // loop_header
      %s12 = sphi 0, %s16
      %p13 = scmp.ge.s32.totalorder %s12, 4
      %s19 = sphi 0, %s31
      %s20 = sphi 0, %s27
      %s21 = sphi 0, %s19
      %s22 = sphi 0, %s20
      %s23 = sphi 0, %s21
      %s24 = sphi 0, %s22
      %s36 = sphi 0, %s38
      %s39 = sphi 0, %s36
      %s40 = sphi 0, %s39
      %s56 = sphi 0, %s40
      %s60 = sphi 0, %s60
      %s62 = sphi 0, %s60
      %s63 = sphi 0, %s62
      %s77 = sphi 0, %s63
      %s83 = sphi 0, %s85
      %s86 = sphi 0, %s83
      %s87 = sphi 0, %s86
      %s103 = sphi 0, %s87
      %s111 = sphi 0, %s113
      %s114 = sphi 0, %s111
      %s115 = sphi 0, %s114
      %s131 = sphi 0, %s115
    $region4: #{patch_embedding.1} parent=1 // loop_header_branch
      %15 = sbr.rel (%p13) target = $region8
    $region5: #{patch_embedding.1} parent=1 // loop_body
      %s17 = ssub.s32 %s12, 1
      %s18 = ssub.s32 %s12, 2
      %s25 = sadd.s32 1, %s20
      %p26 = scmp.ge.s32.totalorder %s25, 2
      %s27 = scalar_select %p26, 0, %s25
      %s28 = sadd.s32 1, %s19
      %s29 = scalar_select %p26, %s28, %s19
      %p30 = scmp.ge.s32.totalorder %s29, 1
      %s31 = scalar_select %p30, 0, %s29
      %s32 = ssub.s32 %s20, %s27
      %s33 = ssub.s32 %s19, %s31
      %s34 = sor.u32 %s32, %s33
      %p35 = scmp.eq.s32.totalorder %s34, 0
      %s37 = sadd.s32 %s36, 1
      %s38 = scalar_select %p35, %s36, %s37
      %p41 = pneg %p35
      %p42 = scmp.eq.s32.totalorder %s12, 1
      %p43 = por %p41, %p42
      %p44 = scmp.ne.s32.totalorder %s36, %s39
      %p45 = scmp.eq.s32.totalorder %s12, 0
      %p46 = por %p44, %p45
      %p47 = scmp.ne.s32.totalorder %s36, %s39
      %p48 = scmp.eq.s32.totalorder %s17, 1
      %p49 = por %p47, %p48
      %p50 = scmp.ne.s32.totalorder %s39, %s40
      %p51 = scmp.eq.s32.totalorder %s17, 0
      %p52 = por %p50, %p51
      %p53 = scmp.ne.s32.totalorder %s39, %s40
      %p54 = scmp.eq.s32.totalorder %s18, 1
      %p55 = por %p53, %p54
      %p57 = scmp.ne.s32.totalorder %s40, %s56
      %p58 = scmp.eq.s32.totalorder %s18, 0
      %p59 = por %p57, %p58
      %s61 = sadd.s32 %s60, 1
      %p64 = scmp.eq.s32.totalorder %s12, 1
      %p65 = scmp.ne.s32.totalorder %s60, %s62
      %p66 = scmp.eq.s32.totalorder %s12, 0
      %p67 = por %p65, %p66
      %p68 = scmp.ne.s32.totalorder %s60, %s62
      %p69 = scmp.eq.s32.totalorder %s17, 1
      %p70 = por %p68, %p69
      %p71 = scmp.ne.s32.totalorder %s62, %s63
      %p72 = scmp.eq.s32.totalorder %s17, 0
      %p73 = por %p71, %p72
      %p74 = scmp.ne.s32.totalorder %s62, %s63
      %p75 = scmp.eq.s32.totalorder %s18, 1
      %p76 = por %p74, %p75
      %p78 = scmp.ne.s32.totalorder %s63, %s77
      %p79 = scmp.eq.s32.totalorder %s18, 0
      %p80 = por %p78, %p79
      %s81 = ssub.s32 %s19, %s31
      %p82 = scmp.eq.s32.totalorder %s81, 0
      %s84 = sadd.s32 %s83, 1
      %s85 = scalar_select %p82, %s83, %s84
      %p88 = pneg %p82
      %p89 = scmp.eq.s32.totalorder %s12, 1
      %p90 = por %p88, %p89
      %p91 = scmp.ne.s32.totalorder %s83, %s86
      %p92 = scmp.eq.s32.totalorder %s12, 0
      %p93 = por %p91, %p92
      %p94 = scmp.ne.s32.totalorder %s83, %s86
      %p95 = scmp.eq.s32.totalorder %s17, 1
      %p96 = por %p94, %p95
      %p97 = scmp.ne.s32.totalorder %s86, %s87
      %p98 = scmp.eq.s32.totalorder %s17, 0
      %p99 = por %p97, %p98
      %p100 = scmp.ne.s32.totalorder %s86, %s87
      %p101 = scmp.eq.s32.totalorder %s18, 1
      %p102 = por %p100, %p101
      %p104 = scmp.ne.s32.totalorder %s87, %s103
      %p105 = scmp.eq.s32.totalorder %s18, 0
      %p106 = por %p104, %p105
      %s107 = ssub.s32 %s20, %s27
      %s108 = ssub.s32 %s19, %s31
      %s109 = sor.u32 %s107, %s108
      %p110 = scmp.eq.s32.totalorder %s109, 0
      %s112 = sadd.s32 %s111, 1
      %s113 = scalar_select %p110, %s111, %s112
      %p116 = pneg %p110
      %p117 = scmp.eq.s32.totalorder %s12, 1
      %p118 = por %p116, %p117
      %p119 = scmp.ne.s32.totalorder %s111, %s114
      %p120 = scmp.eq.s32.totalorder %s12, 0
      %p121 = por %p119, %p120
      %p122 = scmp.ne.s32.totalorder %s111, %s114
      %p123 = scmp.eq.s32.totalorder %s17, 1
      %p124 = por %p122, %p123
      %p125 = scmp.ne.s32.totalorder %s114, %s115
      %p126 = scmp.eq.s32.totalorder %s17, 0
      %p127 = por %p125, %p126
      %p128 = scmp.ne.s32.totalorder %s114, %s115
      %p129 = scmp.eq.s32.totalorder %s18, 1
      %p130 = por %p128, %p129
      %p132 = scmp.ne.s32.totalorder %s115, %s131
      %p133 = scmp.eq.s32.totalorder %s18, 0
      %p134 = por %p132, %p133
      %p135 = scmp.le.s32.totalorder 1, %s12
      %p136 = scmp.lt.s32.totalorder %s12, 3
      %p137 = pnand %p135, %p136
      %p138 = pneg %p137
      // Predicated region
      $region9: #{patch_embedding.1} parent=5 // pred_check
        _
      $region10: #{patch_embedding.1} parent=5 // pred_check_branch
        %140 = sbr.rel (%p137) target = $region12
      $region11: #{patch_embedding.1} parent=5 // pred_region
        %s141 = ssub.s32 %s12, 1
        // Predicated region
        $region13: #{patch_embedding.1} parent=11 // pred_check
          %p142 = pneg %p73
        $region14: #{patch_embedding.1} parent=11 // pred_check_branch
          %144 = sbr.rel (%p142) target = $region16
        $region15: #{patch_embedding.1} parent=11 // pred_region
          _
        $region16: #{patch_embedding.1} parent=11 // pred_fallthru
          _
        // Predicated region
        $region17: #{patch_embedding.1} parent=11 // pred_check
          %p145 = pneg %p99
        $region18: #{patch_embedding.1} parent=11 // pred_check_branch
          %147 = sbr.rel (%p145) target = $region20
        $region19: #{patch_embedding.1} parent=11 // pred_region
          %s148 = smul.u32 2, %s21
          %p149 = scmp.lt.s32.totalorder %s148, 1
          %s150 = scalar_select %p149, %s148, 1
          %s151 = smul.addr %s150, 4
          %s152 = scalar_lea.vmem %s2, %s151
          %s153 = smul.u32 2, %s21
        $region20: #{patch_embedding.1} parent=11 // pred_fallthru
          _
      $region12: #{patch_embedding.1} parent=5 // pred_fallthru
        _
      %p154 = scmp.lt.s32.totalorder %s12, 2
      // Predicated region
      $region21: #{patch_embedding.1} parent=5 // pred_check
        %p155 = pneg %p154
      $region22: #{patch_embedding.1} parent=5 // pred_check_branch
        %157 = sbr.rel (%p155) target = $region24
      $region23: #{patch_embedding.1} parent=5 // pred_region
        // Predicated region
        $region25: #{patch_embedding.1} parent=23 // pred_check
          %p158 = pneg %p46
        $region26: #{patch_embedding.1} parent=23 // pred_check_branch
          %160 = sbr.rel (%p158) target = $region28
        $region27: #{patch_embedding.1} parent=23 // pred_region
          %s161 = smul.u32 2, %s19
          %p162 = scmp.lt.s32.totalorder %s20, 1
          %s163 = scalar_select %p162, %s20, 1
          %p164 = scmp.lt.s32.totalorder %s161, 1
          %s165 = scalar_select %p164, %s161, 1
          %s166 = smul.addr %s163, 2
          %s167 = sadd.s32 %s165, %s166
          %s168 = smul.addr %s167, 4
          %s169 = scalar_lea.vmem %s0, %s168
          %s170 = smul.u32 2, %s19
        $region28: #{patch_embedding.1} parent=23 // pred_fallthru
          _
      $region24: #{patch_embedding.1} parent=5 // pred_fallthru
        _
      %p171 = scmp.le.s32.totalorder 1, %s12
      %p172 = scmp.lt.s32.totalorder %s12, 3
      %p173 = pnand %p171, %p172
      %p174 = pneg %p173
      // Predicated region
      $region29: #{patch_embedding.1} parent=5 // pred_check
        _
      $region30: #{patch_embedding.1} parent=5 // pred_check_branch
        %176 = sbr.rel (%p173) target = $region32
      $region31: #{patch_embedding.1} parent=5 // pred_region
        %s177 = ssub.s32 %s12, 1
        %s178 = smul.u32 2, %s21
        %p179 = scmp.lt.s32.totalorder %s22, 1
        %s180 = scalar_select %p179, %s22, 1
        %p181 = scmp.lt.s32.totalorder %s178, 1
        %s182 = scalar_select %p181, %s178, 1
        %s183 = smul.addr %s180, 2
        %s184 = sadd.s32 %s182, %s183
        %s185 = smul.addr %s184, 4
        %s186 = scalar_lea.vmem %s0, %s185
        %p187 = pneg %p52
        %p188 = pneg %p49
        %p189 = pneg %p73
        %p190 = pneg %p70
        %s191 = smul.u32 2, %s21
        %p192 = scmp.lt.s32.totalorder %s191, 1
        %s193 = scalar_select %p192, %s191, 1
        %s194 = smul.addr %s193, 4
        %s195 = scalar_lea.vmem %s2, %s194
        %p196 = pneg %p99
        %p197 = pneg %p96
        %p198 = pneg %p127
        %p199 = pneg %p124
        %s200 = sand.u32 %s114, 1
        %s201 = scalar_lea.sflag [#allocation3], %s200
        %s202 = sand.u32 %s114, 1
        %s203 = smul.addr %s202, 8
        %s204 = scalar_lea.vmem [#allocation2], %s203
        %s205 = smul.u32 2, %s21
        %p206 = scmp.lt.s32.totalorder %s22, 1
        %s207 = scalar_select %p206, %s22, 1
        %p208 = scmp.lt.s32.totalorder %s205, 1
        %s209 = scalar_select %p208, %s205, 1
        %s210 = smul.addr %s207, 2
        %s211 = sadd.s32 %s209, %s210
        %s212 = smul.addr %s211, 4
        %s213 = scalar_lea.vmem %s0, %s212
        %s214 = smul.u32 2, %s21
        %s215 = smul.u32 2, %s21
        %p216 = scmp.lt.s32.totalorder %s215, 1
        %s217 = scalar_select %p216, %s215, 1
        %s218 = smul.addr %s217, 4
        %s219 = scalar_lea.vmem %s2, %s218
        %s220 = smul.u32 2, %s21
        %s221 = smul.u32 2, %s21
        %v223 = vld [vmem:[%s213] sm:$0xf]
        %v224 = vld [vmem:[%s213 + $0x4] sm:$0xf]
        %v225 = vld [vmem:[%s1] sm:$0xf]
        %v226 = vld [vmem:[%s1 + $0x4] sm:$0xf]
        %v227 = vld [vmem:[%s1 + $0x8] sm:$0xf]
        %v228 = vld [vmem:[%s1 + $0xc] sm:$0xf]
        %v229 = vld [vmem:[%s1 + $0x10] sm:$0xf]
        %v230 = vld [vmem:[%s1 + $0x14] sm:$0xf]
        %v231 = vld [vmem:[%s1 + $0x18] sm:$0xf]
        %v232 = vld [vmem:[%s1 + $0x1c] sm:$0xf]
        %v233 = vld [vmem:[%s219] sm:$0xf]
        %v234 = vld [vmem:[%s219 + $0x4] sm:$0xf]
        %v235 = vunpack.c.l.bf16 %v233
        %v236 = vunpack.c.l.bf16 %v234
        %v239 = vunpack.c.l.b16 %v223
        %v240 = vunpack.c.l.b16 %v224
        %v241 = vpack.c.b16 %v240, %v239
        %v250 = vunpack.c.l.b16 %v225
        %v251 = vunpack.c.l.b16 %v226
        %v252 = vunpack.c.l.b16 %v227
        %v253 = vunpack.c.l.b16 %v228
        %v254 = vunpack.c.l.b16 %v229
        %v255 = vunpack.c.l.b16 %v230
        %v256 = vunpack.c.l.b16 %v231
        %v257 = vunpack.c.l.b16 %v232
        %v258 = vpack.c.b16 %v251, %v250
        %v259 = vpack.c.b16 %v253, %v252
        %v260 = vpack.c.b16 %v255, %v254
        %v261 = vpack.c.b16 %v257, %v256
        %vm266 = vcmask 523264
        %v268 = vsel %vm266, %v241, 0
        %270 = vmatprep.subr.bf16.mxu0 0
        %271 = vmatpush1.bf16.msra.mxu0 0
        %272 = vmatprep.subr.bf16.mxu0 0
        %273 = vmatpush1.bf16.msra.mxu0 0
        %274 = vmatprep.subr.bf16.mxu0 0
        %275 = vmatpush1.bf16.msra.mxu0 0
        %276 = vmatprep.subr.bf16.mxu0 0
        %277 = vmatpush1.bf16.msra.mxu0 0
        %278 = vmatprep.subr.bf16.mxu0 0
        %279 = vmatpush1.bf16.msra.mxu0 %v261
        %280 = vmatprep.subr.bf16.mxu0 0
        %281 = vmatpush1.bf16.msra.mxu0 %v260
        %282 = vmatprep.subr.bf16.mxu0 0
        %283 = vmatpush1.bf16.msra.mxu0 %v259
        %284 = vmatprep.subr.bf16.mxu0 0
        %285 = vmatpush1.bf16.msra.mxu0 %v258
        %286 = vmatprep.subr.bf16.mxu0 0
        %287 = vmatpush2.bf16.msra.mxu0 0
        %288 = vmatprep.subr.bf16.mxu0 0
        %289 = vmatpush2.bf16.msra.mxu0 0
        %290 = vmatprep.subr.bf16.mxu0 0
        %291 = vmatpush2.bf16.msra.mxu0 0
        %292 = vmatprep.subr.bf16.mxu0 0
        %293 = vmatpush2.bf16.msra.mxu0 0
        %294 = vmatprep.subr.bf16.mxu0 0
        %295 = vmatpush2.bf16.msra.mxu0 0
        %296 = vmatprep.subr.bf16.mxu0 0
        %297 = vmatpush2.bf16.msra.mxu0 0
        %298 = vmatprep.subr.bf16.mxu0 0
        %299 = vmatpush2.bf16.msra.mxu0 0
        %300 = vmatprep.subr.bf16.mxu0 0
        %301 = vmatpush2.bf16.msra.mxu0 0
        %302 = vmatprep.mubr.bf16.mxu0 0
        %303 = vmatmul.mubr.bf16.gmra.mxu0 %v268
        %v304 = vpop.f32.mrf.mxu0
        %v305 = vadd.f32 %v235, %v304
        %v306 = vpop.f32.mrf.mxu0
        %v307 = vpop.f32.mrf.mxu0
        %v308 = vadd.f32 %v236, %v307
        %v309 = vpop.f32.mrf.mxu0
        %310 = vdwg.mxu0
        %v311 = vpack.c.bf16 %v308, %v305
        %v313 = vunpack.c.l.b16 %v311
        %v314 = vunpack.c.h.b16 %v311
        %v315 = vpack.c.b16 %v313, %v313
        %v316 = vpack.c.b16 %v314, %v314
        %vm319 = vcmask 257024
        %320 = vst.msk [vmem:[%s204] sm:$0xf] %vm319, %v315
        %321 = vst.msk [vmem:[%s204 + $0x4] sm:$0xf] %vm319, %v316
        %s322 = sand.u32 %s114, 1
        %s323 = scalar_lea.sflag [#allocation3], %s322
        %s324 = sand.u32 %s114, 1
        %s325 = smul.addr %s324, 8
        %s326 = scalar_lea.vmem [#allocation2], %s325
        // Predicated region
        $region33: #{patch_embedding.1} parent=31 // pred_check
          %p327 = pneg %p124
        $region34: #{patch_embedding.1} parent=31 // pred_check_branch
          %329 = sbr.rel (%p327) target = $region36
        $region35: #{patch_embedding.1} parent=31 // pred_region
          %s330 = smul.u32 2, %s21
          %s332 = ssub.s32 128, 128
          %333 = vsyncadd %s323, %s332
          %s334 = smul.addr %s22, 2
          %s335 = sadd.s32 %s330, %s334
          %s336 = smul.addr %s335, 64
          %s337 = scalar_lea.hbm %s3, %s336
          %s338 = sshll.u32 %s326, 4
          %s339 = int_to_ptr.vmem [resolvable:$true] %s338
          %344 = dma.vmem_to_hbm [thread:$0]  %s339, 128, %s337, %s323, 64, 64, 4
        $region36: #{patch_embedding.1} parent=31 // pred_fallthru
          _
      $region32: #{patch_embedding.1} parent=5 // pred_fallthru
        _
      %p345 = scmp.le.s32.totalorder 2, %s12
      // Predicated region
      $region37: #{patch_embedding.1} parent=5 // pred_check
        %p346 = pneg %p345
      $region38: #{patch_embedding.1} parent=5 // pred_check_branch
        %348 = sbr.rel (%p346) target = $region40
      $region39: #{patch_embedding.1} parent=5 // pred_region
        %s349 = ssub.s32 %s12, 2
        // Predicated region
        $region41: #{patch_embedding.1} parent=39 // pred_check
          %p350 = pneg %p130
        $region42: #{patch_embedding.1} parent=39 // pred_check_branch
          %352 = sbr.rel (%p350) target = $region44
        $region43: #{patch_embedding.1} parent=39 // pred_region
          %s353 = sand.u32 %s115, 1
          %s354 = scalar_lea.sflag [#allocation3], %s353
          %s355 = sand.u32 %s115, 1
          %s356 = smul.addr %s355, 8
          %s357 = scalar_lea.vmem [#allocation2], %s356
          %358 = dma.done %s354, 128
        $region44: #{patch_embedding.1} parent=39 // pred_fallthru
          _
      $region40: #{patch_embedding.1} parent=5 // pred_fallthru
        _
    $region6: #{patch_embedding.1} parent=1 // loop_footer
      %s16 = sadd.s32 1, %s12
    $region7: #{patch_embedding.1} parent=1 // loop_footer_branch
      %11 = sbr.rel target = $region3
    $region8: #{patch_embedding.1} parent=1 // loop_exit
      _
    %359 = vsyncpa [#allocation3], 1
    %s360 = scalar_lea.sflag [#allocation3], 1
    %361 = vsyncpa %s360, 1

</llo_original>
